<compile_context>
chip_gen: v7x
topology: tpu7x:2x2x1
jax: 0.10.0
libtpu: 0.0.40
codegen_flags: <defaults>
</compile_context>

<pallas_src>
import jax
import jax.numpy as jnp
from jax import lax
from jax.experimental import pallas as pl
from jax.experimental.pallas import tpu as pltpu


def _round_up(n, m):
    return (n + m - 1) // m * m


def _vmem_capacity_bytes():
    """Per-core VMEM capacity; conservative fallback if the query fails."""
    try:
        info = pltpu.get_tpu_info()
        cap = getattr(info, "vmem_capacity_bytes", None)
        if cap:
            return int(cap)
    except Exception:
        pass
    return 64 * 1024 * 1024  # v7x per-TensorCore VMEM (safe lower bound)


def _pick_d_chunk(d):
    """Chunk the D reduction for large D so the (TB, chunk) product stays bounded."""
    if d <= 1024:
        return d, 1
    for c in (1024, 512, 256, 128):
        if d % c == 0:
            return c, d // c
    return d, 1


def _make_kernel(d_chunk, num_chunks):
    def kernel(x_ref, w_ref, b_ref, o_ref):
        # x_ref: (TB, D) VMEM    w_ref: (1, D) VMEM (resident)
        # b_ref: (1,)   SMEM     o_ref: (1, 1, TB) VMEM (lane-dense output tile)
        bias = b_ref[0]
        if num_chunks <= 1:
            # Multiply at input dtype; accumulate the lane reduction in f32.
            row = jnp.sum(x_ref[...] * w_ref[...], axis=-1, dtype=jnp.float32)
        else:
            tb = x_ref.shape[0]

            def body(c, acc):
                start = pl.multiple_of(c * d_chunk, d_chunk)
                xs = x_ref[:, pl.ds(start, d_chunk)]
                ws = w_ref[:, pl.ds(start, d_chunk)]
                return acc + jnp.sum(xs * ws, axis=-1, dtype=jnp.float32)

            row = lax.fori_loop(0, num_chunks, body,
                                jnp.zeros((tb,), jnp.float32), unroll=True)
        row = row + bias
        o_ref[...] = row.astype(o_ref.dtype).reshape(1, 1, -1)

    return kernel


def loglinear_forward(x, weight, bias, *, block_batch=None):
    """Forward of LogLinear: x @ weight.T + bias.

    x:      (B, D)
    weight: (1, D)  (PyTorch nn.Linear layout; used lane-dense, as-is)
    bias:   (1,)
    returns (B, 1) in x.dtype
    """
    B, D = x.shape
    w = weight.reshape(1, D).astype(x.dtype)
    b = bias.reshape(1).astype(jnp.float32)

    itemsize = x.dtype.itemsize
    bytes_per_row = D * itemsize

    # Generation-aware VMEM budget: double-buffered x uses <= min(cap/2, 64 MiB)
    # -> 2 x 32 MiB tiles on v5e/v6e (128 MiB VMEM), 2 x 16 MiB tiles on v7x.
    vmem_cap = _vmem_capacity_bytes()
    x_db_budget = min(vmem_cap // 2, 64 * 1024 * 1024)
    tile_budget = x_db_budget // 2
    vmem_limit = max(32 * 1024 * 1024,
                     min(vmem_cap * 3 // 4, x_db_budget + 16 * 1024 * 1024))

    # Batch tile: f32 sublane multiple of 8, sized to the tile byte budget.
    TB = max(8, (tile_budget // max(bytes_per_row, 1)) // 8 * 8)
    if block_batch is not None:                       # explicit override only
        TB = min(TB, max(8, _round_up(block_batch, 8)))
    # Always leave >= 2 grid tiles so the "parallel" batch axis can shard
    # across both v7x TensorCores (one harmless extra step on v5e/v6e).
    TB = min(TB, max(8, _round_up(pl.cdiv(B, 2), 8)))

    num_tiles = pl.cdiv(B, TB)
    tile_bytes = TB * bytes_per_row

    # x spec: streamed batch tile; deepen pipelining only when tiles are tiny
    # (exposed DMA issue latency); at the default large tiles 2 buffers is right.
    if tile_bytes < 2 * 1024 * 1024 and num_tiles >= 4:
        x_spec = pl.BlockSpec((TB, D), lambda i: (i, 0),
                              pipeline_mode=pl.Buffered(3))
    else:
        x_spec = pl.BlockSpec((TB, D), lambda i: (i, 0))

    d_chunk, num_chunks = _pick_d_chunk(D)
    kernel = _make_kernel(d_chunk, num_chunks)

    out_dtype = x.dtype
    cost = pl.CostEstimate(
        flops=2 * B * D,
        transcendentals=0,
        bytes_accessed=B * D * itemsize + D * itemsize
        + num_tiles * TB * jnp.dtype(out_dtype).itemsize,
    )

    out = pl.pallas_call(
        kernel,
        out_shape=jax.ShapeDtypeStruct((num_tiles, 1, TB), out_dtype),
        grid=(num_tiles,),
        in_specs=[
            x_spec,                                              # streamed x tile
            pl.BlockSpec((1, D), lambda i: (0, 0)),              # resident weight row
            pl.BlockSpec(memory_space=pltpu.MemorySpace.SMEM),   # scalar bias
        ],
        out_specs=pl.BlockSpec((1, 1, TB), lambda i: (i, 0, 0)),
        compiler_params=pltpu.CompilerParams(
            dimension_semantics=("parallel",),
            vmem_limit_bytes=int(vmem_limit),
        ),
        cost_estimate=cost,
    )(x, w, b)

    # (num_tiles, 1, TB) -> (num_tiles*TB, 1) -> drop ragged-tail garbage rows.
    return out.reshape(num_tiles * TB, 1)[:B]


if __name__ == "__main__":
    # Small deterministic setup consistent with the module: batch=10 (exercises
    # the ragged last tile + the >=2-grid-tile path), embedding_dim=32.
    batch, embedding_dim = 10, 32
    key = jax.random.PRNGKey(0)
    kx, kw, kb = jax.random.split(key, 3)

    # Mimic PyTorch nn.Linear default init: U(-1/sqrt(D), 1/sqrt(D)).
    bound = 1.0 / jnp.sqrt(jnp.float32(embedding_dim))
    weight = jax.random.uniform(kw, (1, embedding_dim), jnp.float32, -bound, bound)
    bias = jax.random.uniform(kb, (1,), jnp.float32, -bound, bound)
    x = jax.random.normal(kx, (batch, embedding_dim), jnp.float32)

    out = loglinear_forward(x, weight, bias)
    out = jax.block_until_ready(out)

    # Reference check in plain JAX (h1 = x @ W^T + b).
    ref = x @ weight.T + bias
    assert out.shape == (batch, 1)
    assert jnp.allclose(out, ref, atol=1e-5, rtol=1e-5)

    print("KERNEL_OK")
</pallas_src>

<mosaic_0001>
module attributes {stable_mosaic.version = 11 : i64} {
  func.func @kernel(%arg0: i32, %arg1: memref<8x32xf32, #tpu.memory_space<vmem>>, %arg2: memref<1x32xf32, #tpu.memory_space<vmem>>, %arg3: memref<1xf32, #tpu.memory_space<smem>>, %arg4: memref<1x1x8xf32, #tpu.memory_space<vmem>>) attributes {dimension_semantics = [#tpu.dimension_semantics<parallel>], iteration_bounds = array<i64: 2>, scalar_prefetch = 0 : i64, scratch_operands = 0 : i64, tpu.core_type = #tpu.core_type<tc>, window_params = [{transform_indices = @transform_0, window_bounds = array<i64: 8, 32>}, {pipeline_mode = #tpu.pipeline_mode<synchronous>, transform_indices = @transform_1, window_bounds = array<i64: 1, 32>}, {transform_indices = @transform_2, window_bounds = array<i64: 1>}, {transform_indices = @transform_3, window_bounds = array<i64: 1, 1, 8>}]} {
    %c0 = arith.constant 0 : index
    %0 = memref.load %arg3[%c0] : memref<1xf32, #tpu.memory_space<smem>>
    %c0_0 = arith.constant 0 : index
    %c0_1 = arith.constant 0 : index
    %1 = vector.load %arg1[%c0_0, %c0_1] : memref<8x32xf32, #tpu.memory_space<vmem>>, vector<8x32xf32>
    %c0_2 = arith.constant 0 : index
    %c0_3 = arith.constant 0 : index
    %2 = vector.load %arg2[%c0_2, %c0_3] : memref<1x32xf32, #tpu.memory_space<vmem>>, vector<1x32xf32>
    %3 = vector.broadcast %2 : vector<1x32xf32> to vector<8x32xf32>
    %4 = arith.mulf %1, %3 : vector<8x32xf32>
    %cst = arith.constant dense<0.000000e+00> : vector<8xf32>
    %5 = vector.multi_reduction <add>, %4, %cst [1] : vector<8x32xf32> to vector<8xf32>
    %6 = vector.broadcast %0 : f32 to vector<8xf32>
    %7 = arith.addf %5, %6 : vector<8xf32>
    %8 = vector.shape_cast %7 : vector<8xf32> to vector<1x1x8xf32>
    %c0_4 = arith.constant 0 : index
    %c0_5 = arith.constant 0 : index
    %c0_6 = arith.constant 0 : index
    %9 = vector.load %arg4[%c0_4, %c0_5, %c0_6] : memref<1x1x8xf32, #tpu.memory_space<vmem>>, vector<1x1x8xf32>
    tpu.vector_store %arg4[%c0_4, %c0_5, %c0_6], %8 {strides = array<i32>} : memref<1x1x8xf32, #tpu.memory_space<vmem>>, vector<1x1x8xf32>,
    return
  }
  func.func @transform_0(%arg0: i32) -> (i32, i32) {
    %c0_i32 = arith.constant 0 : i32
    %c0_i32_0 = arith.constant 0 : i32
    return %arg0, %c0_i32 : i32, i32
  }
  func.func @transform_1(%arg0: i32) -> (i32, i32) {
    %c0_i32 = arith.constant 0 : i32
    %c0_i32_0 = arith.constant 0 : i32
    %c0_i32_1 = arith.constant 0 : i32
    return %c0_i32, %c0_i32_0 : i32, i32
  }
  func.func @transform_2(%arg0: i32) -> i32 {
    %c0_i32 = arith.constant 0 : i32
    %c0_i32_0 = arith.constant 0 : i32
    return %c0_i32 : i32
  }
  func.func @transform_3(%arg0: i32) -> (i32, i32, i32) {
    %c0_i32 = arith.constant 0 : i32
    %c0_i32_0 = arith.constant 0 : i32
    %c0_i32_1 = arith.constant 0 : i32
    return %arg0, %c0_i32, %c0_i32_0 : i32, i32, i32
  }
}

</mosaic_0001>

<llo_original>
// kernel: tpu_custom_call.1
$region0: #{tpu_custom_call.1}
  #allocation0 [shape = 'u32[]', space=smem, size = 0x4, offset = 0x4, fixed_abs, tag = 'smem constant byte address 0x4 - core index']
  #allocation1 [shape = 'u32[144,128]{1,0:T(1,128)}', space=vmem, size = 0x12000, scoped, tag = 'internal scratch']
  #allocation2 [shape = 'f32[1]{0:T(128)S(6)}', space=smem, size = 0x200, scoped, tag = 'scoped memory for tpu_custom_call.1']
  %s0 = inlined_call_operand.hbm [shape: f32[10,32], index: 0, kind: input, shape index: {}]
  %s1 = inlined_call_operand.vmem [shape: f32[1,32], index: 1, kind: input, shape index: {}]
  %s2 = inlined_call_operand.<no memory space> [shape: f32[1], index: 2, kind: input, shape index: {}]
  %s3 = inlined_call_operand.hbm [shape: f32[2,1,8], index: 3, kind: output, shape index: {}]
  %s4 = sld [smem:[#allocation0]]
  $region49: #{tpu_custom_call.1} parent=0
    _
  %s6 = ssub.s32 1, %s4
  %s7 = scalar_select 0, %s6, %s4
  %8 = sst [smem:[#allocation2]] %s2
  $region1: #{tpu_custom_call.1} parent=0
    #allocation3 [shape = 'u8[8192]{0}', space=vmem, size = 0x2000, scoped, tag = 'input window, operand 0']
    #allocation4 [shape = 's32[2]{0}', space=sflag, size = 0x8, scoped, tag = 'scoped memory for tpu_custom_call.1']
    #allocation5 [shape = 's32[2]{0}', space=sflag, size = 0x8, scoped, tag = 'scoped memory for tpu_custom_call.1']
    #allocation6 [shape = 'u8[1024]{0}', space=vmem, size = 0x400, scoped, tag = 'output window, operand 0']
    %9 = vsyncpa [#allocation4], 0
    %s10 = scalar_lea.sflag [#allocation4], 1
    %11 = vsyncpa %s10, 0
    %12 = vsyncpa [#allocation5], 0
    %s13 = scalar_lea.sflag [#allocation5], 1
    %14 = vsyncpa %s13, 0
    loop: start=0, step=1, limit=4
    $region2: #{tpu_custom_call.1} parent=1 // loop_pre_header
      _
    $region3: #{tpu_custom_call.1} parent=1 // loop_header
      %s16 = sphi 0, %s20
      %p17 = scmp.ge.s32.totalorder %s16, 4
      %s26 = sphi 0, %s28
      %s29 = sphi 0, %s26
      %s30 = sphi 0, %s29
      %s46 = sphi 0, %s30
      %s50 = sphi 0, %s50
      %s52 = sphi 0, %s50
      %s53 = sphi 0, %s52
      %s67 = sphi 0, %s53
      %s71 = sphi 0, %s71
      %s73 = sphi 0, %s71
      %s74 = sphi 0, %s73
      %s88 = sphi 0, %s74
      %s94 = sphi 0, %s96
      %s97 = sphi 0, %s94
      %s98 = sphi 0, %s97
      %s114 = sphi 0, %s98
    $region4: #{tpu_custom_call.1} parent=1 // loop_header_branch
      %19 = sbr.rel (%p17) target = $region8
    $region5: #{tpu_custom_call.1} parent=1 // loop_body
      %s21 = ssub.s32 %s16, 1
      %s22 = ssub.s32 %s16, 2
      %s23 = sadd.s32 %s16, 1
      %s24 = ssub.s32 %s16, %s23
      %p25 = scmp.eq.s32.totalorder %s24, 0
      %s27 = sadd.s32 %s26, 1
      %s28 = scalar_select %p25, %s26, %s27
      %p31 = pneg %p25
      %p32 = scmp.eq.s32.totalorder %s16, 1
      %p33 = por %p31, %p32
      %p34 = scmp.ne.s32.totalorder %s26, %s29
      %p35 = scmp.eq.s32.totalorder %s16, 0
      %p36 = por %p34, %p35
      %p37 = scmp.ne.s32.totalorder %s26, %s29
      %p38 = scmp.eq.s32.totalorder %s21, 1
      %p39 = por %p37, %p38
      %p40 = scmp.ne.s32.totalorder %s29, %s30
      %p41 = scmp.eq.s32.totalorder %s21, 0
      %p42 = por %p40, %p41
      %p43 = scmp.ne.s32.totalorder %s29, %s30
      %p44 = scmp.eq.s32.totalorder %s22, 1
      %p45 = por %p43, %p44
      %p47 = scmp.ne.s32.totalorder %s30, %s46
      %p48 = scmp.eq.s32.totalorder %s22, 0
      %p49 = por %p47, %p48
      %s51 = sadd.s32 %s50, 1
      %p54 = scmp.eq.s32.totalorder %s16, 1
      %p55 = scmp.ne.s32.totalorder %s50, %s52
      %p56 = scmp.eq.s32.totalorder %s16, 0
      %p57 = por %p55, %p56
      %p58 = scmp.ne.s32.totalorder %s50, %s52
      %p59 = scmp.eq.s32.totalorder %s21, 1
      %p60 = por %p58, %p59
      %p61 = scmp.ne.s32.totalorder %s52, %s53
      %p62 = scmp.eq.s32.totalorder %s21, 0
      %p63 = por %p61, %p62
      %p64 = scmp.ne.s32.totalorder %s52, %s53
      %p65 = scmp.eq.s32.totalorder %s22, 1
      %p66 = por %p64, %p65
      %p68 = scmp.ne.s32.totalorder %s53, %s67
      %p69 = scmp.eq.s32.totalorder %s22, 0
      %p70 = por %p68, %p69
      %s72 = sadd.s32 %s71, 1
      %p75 = scmp.eq.s32.totalorder %s16, 1
      %p76 = scmp.ne.s32.totalorder %s71, %s73
      %p77 = scmp.eq.s32.totalorder %s16, 0
      %p78 = por %p76, %p77
      %p79 = scmp.ne.s32.totalorder %s71, %s73
      %p80 = scmp.eq.s32.totalorder %s21, 1
      %p81 = por %p79, %p80
      %p82 = scmp.ne.s32.totalorder %s73, %s74
      %p83 = scmp.eq.s32.totalorder %s21, 0
      %p84 = por %p82, %p83
      %p85 = scmp.ne.s32.totalorder %s73, %s74
      %p86 = scmp.eq.s32.totalorder %s22, 1
      %p87 = por %p85, %p86
      %p89 = scmp.ne.s32.totalorder %s74, %s88
      %p90 = scmp.eq.s32.totalorder %s22, 0
      %p91 = por %p89, %p90
      %s92 = ssub.s32 %s16, %s23
      %p93 = scmp.eq.s32.totalorder %s92, 0
      %s95 = sadd.s32 %s94, 1
      %s96 = scalar_select %p93, %s94, %s95
      %p99 = pneg %p93
      %p100 = scmp.eq.s32.totalorder %s16, 1
      %p101 = por %p99, %p100
      %p102 = scmp.ne.s32.totalorder %s94, %s97
      %p103 = scmp.eq.s32.totalorder %s16, 0
      %p104 = por %p102, %p103
      %p105 = scmp.ne.s32.totalorder %s94, %s97
      %p106 = scmp.eq.s32.totalorder %s21, 1
      %p107 = por %p105, %p106
      %p108 = scmp.ne.s32.totalorder %s97, %s98
      %p109 = scmp.eq.s32.totalorder %s21, 0
      %p110 = por %p108, %p109
      %p111 = scmp.ne.s32.totalorder %s97, %s98
      %p112 = scmp.eq.s32.totalorder %s22, 1
      %p113 = por %p111, %p112
      %p115 = scmp.ne.s32.totalorder %s98, %s114
      %p116 = scmp.eq.s32.totalorder %s22, 0
      %p117 = por %p115, %p116
      %p118 = scmp.le.s32.totalorder 1, %s16
      %p119 = scmp.lt.s32.totalorder %s16, 3
      %p120 = pnand %p118, %p119
      %p121 = pneg %p120
      // Predicated region
      $region9: #{tpu_custom_call.1} parent=5 // pred_check
        _
      $region10: #{tpu_custom_call.1} parent=5 // pred_check_branch
        %123 = sbr.rel (%p120) target = $region12
      $region11: #{tpu_custom_call.1} parent=5 // pred_region
        %s124 = ssub.s32 %s16, 1
        // Predicated region
        $region13: #{tpu_custom_call.1} parent=11 // pred_check
          %p125 = pneg %p63
        $region14: #{tpu_custom_call.1} parent=11 // pred_check_branch
          %127 = sbr.rel (%p125) target = $region16
        $region15: #{tpu_custom_call.1} parent=11 // pred_region
          _
        $region16: #{tpu_custom_call.1} parent=11 // pred_fallthru
          _
        // Predicated region
        $region17: #{tpu_custom_call.1} parent=11 // pred_check
          %p128 = pneg %p84
        $region18: #{tpu_custom_call.1} parent=11 // pred_check_branch
          %130 = sbr.rel (%p128) target = $region20
        $region19: #{tpu_custom_call.1} parent=11 // pred_region
          _
        $region20: #{tpu_custom_call.1} parent=11 // pred_fallthru
          _
      $region12: #{tpu_custom_call.1} parent=5 // pred_fallthru
        _
      %p131 = scmp.lt.s32.totalorder %s16, 2
      // Predicated region
      $region21: #{tpu_custom_call.1} parent=5 // pred_check
        %p132 = pneg %p131
      $region22: #{tpu_custom_call.1} parent=5 // pred_check_branch
        %134 = sbr.rel (%p132) target = $region24
      $region23: #{tpu_custom_call.1} parent=5 // pred_region
        // Predicated region
        $region25: #{tpu_custom_call.1} parent=23 // pred_check
          %p135 = pneg %p36
        $region26: #{tpu_custom_call.1} parent=23 // pred_check_branch
          %137 = sbr.rel (%p135) target = $region28
        $region27: #{tpu_custom_call.1} parent=23 // pred_region
          %s138 = sand.u32 %s26, 1
          %s139 = scalar_lea.sflag [#allocation4], %s138
          %s140 = sand.u32 %s26, 1
          %s141 = smul.addr %s140, 8
          %s142 = scalar_lea.vmem [#allocation3], %s141
          %s144 = ssub.s32 128, 128
          %145 = vsyncadd %s139, %s144
          %s146 = smul.addr %s16, 128
          %s147 = scalar_lea.hbm %s0, %s146
          %s149 = sshll.u32 %s142, 4
          %s150 = int_to_ptr.vmem [resolvable:$true] %s149
          %152 = dma.hbm_to_vmem [thread:$0]  %s147, 128, %s150, %s139
        $region28: #{tpu_custom_call.1} parent=23 // pred_fallthru
          _
      $region24: #{tpu_custom_call.1} parent=5 // pred_fallthru
        _
      %p153 = scmp.le.s32.totalorder 1, %s16
      %p154 = scmp.lt.s32.totalorder %s16, 3
      %p155 = pnand %p153, %p154
      %p156 = pneg %p155
      // Predicated region
      $region29: #{tpu_custom_call.1} parent=5 // pred_check
        _
      $region30: #{tpu_custom_call.1} parent=5 // pred_check_branch
        %158 = sbr.rel (%p155) target = $region32
      $region31: #{tpu_custom_call.1} parent=5 // pred_region
        %s159 = ssub.s32 %s16, 1
        %s160 = sand.u32 %s29, 1
        %s161 = scalar_lea.sflag [#allocation4], %s160
        %s162 = sand.u32 %s29, 1
        %s163 = smul.addr %s162, 8
        %s164 = scalar_lea.vmem [#allocation3], %s163
        // Predicated region
        $region33: #{tpu_custom_call.1} parent=31 // pred_check
          %p165 = pneg %p42
        $region34: #{tpu_custom_call.1} parent=31 // pred_check_branch
          %167 = sbr.rel (%p165) target = $region36
        $region35: #{tpu_custom_call.1} parent=31 // pred_region
          %168 = dma.done %s161, 128
        $region36: #{tpu_custom_call.1} parent=31 // pred_fallthru
          _
        %s169 = sand.u32 %s29, 1
        %s170 = scalar_lea.sflag [#allocation4], %s169
        %s171 = sand.u32 %s29, 1
        %s172 = smul.addr %s171, 8
        %s173 = scalar_lea.vmem [#allocation3], %s172
        %p174 = pneg %p42
        %p175 = pneg %p39
        %p176 = pneg %p63
        %p177 = pneg %p60
        %p178 = pneg %p84
        %p179 = pneg %p81
        %p180 = pneg %p110
        %p181 = pneg %p107
        %s182 = sand.u32 %s97, 1
        %s183 = scalar_lea.sflag [#allocation5], %s182
        %s184 = sand.u32 %s97, 1
        %s185 = scalar_lea.vmem [#allocation6], %s184
        %s186 = sld [smem:[#allocation2]]
        %v187 = vld [vmem:[%s164] sm:$0xff]
        %v188 = vld [vmem:[%s1] sm:$0x1]
        %v190 = vlaneseq
        %v191 = vshrl.u32 %v190, 7
        %v192 = vsub.s32 0, %v191
        %v193 = vrot.slane %v188, %v192
        %v195 = vmul.f32 %v187, %v193
        %vm196 = vcmask 261120
        %v197 = vsel %vm196, %v195, 0.0
        %198 = vadd.xlane.f32.xlu0 %v197
        %v199 = vpop.xlane.xlu0 %198
        %v200 = vstv %s186
        %v201 = vadd.f32 %v199, %v200
        %v203 = vlaneseq
        %v204 = vand.u32 %v203, 127
        %v205 = vlaneseq
        %v206 = vshrl.u32 %v205, 7
        %v207 = vsub.s32 %v204, %v206
        %v208 = vrot.slane %v201, %v207
        %vm210 = vcmask 57344
        %211 = vst.msk [vmem:[%s185] sm:$0x1] %vm210, %v208
        %s212 = sand.u32 %s97, 1
        %s213 = scalar_lea.sflag [#allocation5], %s212
        %s214 = sand.u32 %s97, 1
        %s215 = scalar_lea.vmem [#allocation6], %s214
        // Predicated region
        $region37: #{tpu_custom_call.1} parent=31 // pred_check
          %p216 = pneg %p107
        $region38: #{tpu_custom_call.1} parent=31 // pred_check_branch
          %218 = sbr.rel (%p216) target = $region40
        $region39: #{tpu_custom_call.1} parent=31 // pred_region
          %s220 = ssub.s32 16, 16
          %221 = vsyncadd %s213, %s220
          %s222 = smul.addr %s21, 16
          %s223 = scalar_lea.hbm %s3, %s222
          %s225 = sshll.u32 %s215, 4
          %s226 = int_to_ptr.vmem [resolvable:$true] %s225
          %228 = dma.vmem_to_hbm [thread:$0]  %s226, 16, %s223, %s213
        $region40: #{tpu_custom_call.1} parent=31 // pred_fallthru
          _
      $region32: #{tpu_custom_call.1} parent=5 // pred_fallthru
        _
      %p229 = scmp.le.s32.totalorder 2, %s16
      // Predicated region
      $region41: #{tpu_custom_call.1} parent=5 // pred_check
        %p230 = pneg %p229
      $region42: #{tpu_custom_call.1} parent=5 // pred_check_branch
        %232 = sbr.rel (%p230) target = $region44
      $region43: #{tpu_custom_call.1} parent=5 // pred_region
        %s233 = ssub.s32 %s16, 2
        // Predicated region
        $region45: #{tpu_custom_call.1} parent=43 // pred_check
          %p234 = pneg %p113
        $region46: #{tpu_custom_call.1} parent=43 // pred_check_branch
          %236 = sbr.rel (%p234) target = $region48
        $region47: #{tpu_custom_call.1} parent=43 // pred_region
          %s237 = sand.u32 %s98, 1
          %s238 = scalar_lea.sflag [#allocation5], %s237
          %s239 = sand.u32 %s98, 1
          %s240 = scalar_lea.vmem [#allocation6], %s239
          %241 = dma.done %s238, 16
        $region48: #{tpu_custom_call.1} parent=43 // pred_fallthru
          _
      $region44: #{tpu_custom_call.1} parent=5 // pred_fallthru
        _
    $region6: #{tpu_custom_call.1} parent=1 // loop_footer
      %s20 = sadd.s32 1, %s16
    $region7: #{tpu_custom_call.1} parent=1 // loop_footer_branch
      %15 = sbr.rel target = $region3
    $region8: #{tpu_custom_call.1} parent=1 // loop_exit
      _
    %242 = vsyncpa [#allocation4], 1
    %s243 = scalar_lea.sflag [#allocation4], 1
    %244 = vsyncpa %s243, 1
    %245 = vsyncpa [#allocation5], 1
    %s246 = scalar_lea.sflag [#allocation5], 1
    %247 = vsyncpa %s246, 1

</llo_original>
